<compile_context>
chip_gen: v5e
topology: v5e:2x2
jax: 0.10.0
libtpu: 0.0.40
codegen_flags: <defaults>
</compile_context>

<pallas_src>
from functools import partial

import jax
import jax.numpy as jnp
from jax.experimental import pallas as pl
from jax.experimental.pallas import tpu as pltpu


def _round_up(x, m):
    return (x + m - 1) // m * m


def _lm_head_kernel(x_ref, w_ref, o_ref):
    # x_ref: (TILE_N, H), w_ref: (H, TILE_O), o_ref: (TILE_N, TILE_O)
    o_ref[...] = jnp.dot(
        x_ref[...], w_ref[...],
        preferred_element_type=jnp.float32,
    ).astype(o_ref.dtype)


def prepare_lm_head_weights(weight_v, weight_g, *,
                            compute_dtype=jnp.bfloat16, tile_o=2560):
    """Fold weight_norm and fuse the num_vq heads ONCE (call at model load).

    weight_v: (num_vq, V, H)  weight_norm 'v' parameter
    weight_g: (num_vq, V, 1)  weight_norm 'g' parameter
    Returns w_t: (H, o_pad) in compute_dtype, o_pad a multiple of 128
    (and of tile_o if more than one O tile is needed). Padding columns are zero.
    """
    num_vq, V, H = weight_v.shape
    assert weight_g.shape == (num_vq, V, 1)

    # weight_norm, PyTorch default dim=0: per-output-row L2 norm over H.
    v32 = weight_v.astype(jnp.float32)
    g32 = weight_g.astype(jnp.float32)
    w_eff = g32 * v32 / jnp.sqrt(jnp.sum(v32 * v32, axis=-1, keepdims=True))

    O = num_vq * V
    w_t = jnp.transpose(w_eff.reshape(O, H))          # (H, O)

    o_pad = _round_up(O, 128)
    if o_pad > tile_o:
        o_pad = _round_up(O, tile_o)
    if o_pad != O:
        w_t = jnp.pad(w_t, ((0, 0), (0, o_pad - O)))
    return w_t.astype(compute_dtype)


def lm_head_infer_code(hidden_states, w_t, num_vq, V, *,
                       tile_n=512, tile_o=2560, out_dtype=jnp.float32):
    """hidden_states: (B, T, H);  w_t: prepared fused weight (H, o_pad).
    Returns logits (B, T, num_vq, V) in out_dtype (f32 accumulation inside)."""
    B, T, H = hidden_states.shape
    H_w, o_pad = w_t.shape
    assert H_w == H
    O = num_vq * V
    assert o_pad >= O and o_pad % 128 == 0

    x = hidden_states.reshape(B * T, H).astype(w_t.dtype)
    N = B * T

    # N tiling: whole axis if it fits one (8-aligned) tile, else pad to tiles.
    n_pad = _round_up(N, 8)
    if n_pad <= tile_n:
        tn = n_pad
    else:
        tn = tile_n
        n_pad = _round_up(N, tn)
    if n_pad != N:
        x = jnp.pad(x, ((0, n_pad - N), (0, 0)))

    # O tiling: prefer the whole (padded) axis -> weight stays VMEM-resident.
    if o_pad <= tile_o:
        to = o_pad
    else:
        assert o_pad % tile_o == 0, "prepare_lm_head_weights must use same tile_o"
        to = tile_o

    # O tiles OUTER, N tiles INNER: the weight block index depends only on the
    # outer axis, so Pallas fetches each weight tile from HBM exactly once.
    grid = (o_pad // to, n_pad // tn)

    in_bytes = jnp.dtype(w_t.dtype).itemsize
    out_bytes = jnp.dtype(out_dtype).itemsize
    cost = pl.CostEstimate(
        flops=2 * n_pad * H * o_pad,
        transcendentals=0,
        bytes_accessed=(n_pad * H + H * o_pad) * in_bytes
                       + n_pad * o_pad * out_bytes,
    )

    out = pl.pallas_call(
        _lm_head_kernel,
        out_shape=jax.ShapeDtypeStruct((n_pad, o_pad), out_dtype),
        grid_spec=pltpu.PrefetchScalarGridSpec(
            num_scalar_prefetch=0,
            grid=grid,
            in_specs=[
                pl.BlockSpec((tn, H), lambda j, i: (i, 0)),   # hidden rows
                pl.BlockSpec((H, to), lambda j, i: (0, j)),   # fused head cols
            ],
            out_specs=pl.BlockSpec((tn, to), lambda j, i: (i, j)),
        ),
        compiler_params=pltpu.CompilerParams(
            dimension_semantics=("parallel", "parallel")),
        cost_estimate=cost,
    )(x, w_t)

    return out[:N, :O].reshape(B, T, num_vq, V)


def lm_head_infer_code_from_params(hidden_states, weight_v, weight_g, **kw):
    """One-shot convenience (folds weights every call).  For decode loops,
    call prepare_lm_head_weights() once and lm_head_infer_code() per step."""
    num_vq, V, _ = weight_v.shape
    w_t = prepare_lm_head_weights(
        weight_v, weight_g,
        compute_dtype=kw.pop("compute_dtype", jnp.bfloat16),
        tile_o=kw.get("tile_o", 2560))
    return lm_head_infer_code(hidden_states, w_t, num_vq, V, **kw)


def _reference(hidden_states, weight_v, weight_g, *, compute_dtype=jnp.float32):
    # Pure-JAX reference of the PyTorch module (stack of weight-normed heads),
    # with inputs rounded to compute_dtype to match the kernel's compute path.
    v32 = weight_v.astype(jnp.float32)
    g32 = weight_g.astype(jnp.float32)
    w_eff = g32 * v32 / jnp.sqrt(jnp.sum(v32 * v32, axis=-1, keepdims=True))
    x = hidden_states.astype(compute_dtype).astype(jnp.float32)
    w = w_eff.astype(compute_dtype).astype(jnp.float32)
    return jnp.einsum('bth,qvh->btqv', x, w)


if __name__ == "__main__":
    # Small, deterministic shapes consistent with the module's forward
    # (ChatTTS real sizes: H=768, V=626, num_vq=4).
    B, T = 2, 8          # batch, sequence
    num_vq = 4           # number of vector quantizers / heads
    V = 256              # num_audio_tokens (per-head logit width)
    H = 128              # gpt hidden size (lane-dense)

    key = jax.random.PRNGKey(0)
    k_h, k_v, k_g = jax.random.split(key, 3)

    hidden_states = jax.random.normal(k_h, (B, T, H), dtype=jnp.float32)
    weight_v = jax.random.normal(k_v, (num_vq, V, H), dtype=jnp.float32) * 0.02
    weight_g = jax.random.uniform(k_g, (num_vq, V, 1), dtype=jnp.float32,
                                  minval=0.5, maxval=1.5)

    # --- default path: bf16 compute, weights prepared once (as in decode) ---
    w_t_bf16 = prepare_lm_head_weights(weight_v, weight_g,
                                       compute_dtype=jnp.bfloat16)
    out_bf16 = lm_head_infer_code(hidden_states, w_t_bf16, num_vq, V)
    out_bf16 = jax.block_until_ready(out_bf16)
    assert out_bf16.shape == (B, T, num_vq, V), out_bf16.shape
    ref_bf16 = _reference(hidden_states, weight_v, weight_g,
                          compute_dtype=jnp.bfloat16)
    assert jnp.allclose(out_bf16, ref_bf16, atol=5e-3, rtol=5e-3), \
        "bf16 path mismatch vs reference"

    # --- f32 compute path: strict check against full-precision reference ---
    w_t_f32 = prepare_lm_head_weights(weight_v, weight_g,
                                      compute_dtype=jnp.float32)
    out_f32 = jax.block_until_ready(
        lm_head_infer_code(hidden_states, w_t_f32, num_vq, V))
    ref_f32 = _reference(hidden_states, weight_v, weight_g,
                         compute_dtype=jnp.float32)
    assert jnp.allclose(out_f32, ref_f32, atol=1e-4, rtol=1e-4), \
        "f32 path mismatch vs reference"

    print("KERNEL_OK")
</pallas_src>

<mosaic_0001>
module attributes {stable_mosaic.version = 11 : i64} {
  func.func @_lm_head_kernel(%arg0: i32, %arg1: i32, %arg2: memref<16x128xbf16, #tpu.memory_space<vmem>>, %arg3: memref<128x1024xbf16, #tpu.memory_space<vmem>>, %arg4: memref<16x1024xf32, #tpu.memory_space<vmem>>) attributes {dimension_semantics = [#tpu.dimension_semantics<parallel>, #tpu.dimension_semantics<parallel>], iteration_bounds = array<i64: 1, 1>, scalar_prefetch = 0 : i64, scratch_operands = 0 : i64, tpu.core_type = #tpu.core_type<tc>, window_params = [{transform_indices = @transform_0, window_bounds = array<i64: 16, 128>}, {transform_indices = @transform_1, window_bounds = array<i64: 128, 1024>}, {transform_indices = @transform_2, window_bounds = array<i64: 16, 1024>}]} {
    %c0 = arith.constant 0 : index
    %c0_0 = arith.constant 0 : index
    %0 = vector.load %arg2[%c0, %c0_0] : memref<16x128xbf16, #tpu.memory_space<vmem>>, vector<16x128xbf16>
    %c0_1 = arith.constant 0 : index
    %c0_2 = arith.constant 0 : index
    %1 = vector.load %arg3[%c0_1, %c0_2] : memref<128x1024xbf16, #tpu.memory_space<vmem>>, vector<128x1024xbf16>
    %cst = arith.constant dense<0.000000e+00> : vector<16x1024xf32>
    %2 = tpu.matmul %0, %1, %cst {dimension_numbers = #tpu.dot_dimension_numbers<[1], [0], [0], [1], [0, 0, 1, 1], [], []>} : vector<16x128xbf16>, vector<128x1024xbf16>, vector<16x1024xf32> -> vector<16x1024xf32>
    %c0_3 = arith.constant 0 : index
    %c0_4 = arith.constant 0 : index
    %3 = vector.load %arg4[%c0_3, %c0_4] : memref<16x1024xf32, #tpu.memory_space<vmem>>, vector<16x1024xf32>
    tpu.vector_store %arg4[%c0_3, %c0_4], %2 {strides = array<i32>} : memref<16x1024xf32, #tpu.memory_space<vmem>>, vector<16x1024xf32>,
    return
  }
  func.func @transform_0(%arg0: i32, %arg1: i32) -> (i32, i32) {
    %c0_i32 = arith.constant 0 : i32
    %c0_i32_0 = arith.constant 0 : i32
    return %arg1, %c0_i32 : i32, i32
  }
  func.func @transform_1(%arg0: i32, %arg1: i32) -> (i32, i32) {
    %c0_i32 = arith.constant 0 : i32
    %c0_i32_0 = arith.constant 0 : i32
    return %c0_i32, %arg0 : i32, i32
  }
  func.func @transform_2(%arg0: i32, %arg1: i32) -> (i32, i32) {
    %c0_i32 = arith.constant 0 : i32
    return %arg1, %arg0 : i32, i32
  }
}

</mosaic_0001>

<llo_original>
// kernel: tpu_custom_call.1
$region0: #{tpu_custom_call.1}
  #allocation0 [shape = 'u32[]', space=smem, size = 0x4, offset = 0x4, fixed_abs, tag = 'smem constant byte address 0x4 - core index']
  #allocation1 [shape = 'u32[72,128]{1,0:T(1,128)}', space=vmem, size = 0x9000, scoped, tag = 'internal scratch']
  %s0 = inlined_call_operand.hbm [shape: bf16[16,128], index: 0, kind: input, shape index: {}]
  %s1 = inlined_call_operand.hbm [shape: bf16[128,1024], index: 1, kind: input, shape index: {}]
  %s2 = inlined_call_operand.hbm [shape: f32[16,1024], index: 2, kind: output, shape index: {}]
  %s3 = sld [smem:[#allocation0]]
  $region26: #{tpu_custom_call.1} parent=0
    _
  %s5 = ssub.s32 1, %s3
  %s6 = scalar_select 0, %s5, %s3
  $region1: #{tpu_custom_call.1} parent=0
    #allocation2 [shape = 'u8[4096]{0}', space=vmem, size = 0x1000, scoped, tag = 'input window, operand 0, single buffered']
    #allocation3 [shape = 's32[1]{0}', space=sflag, size = 0x4, scoped, tag = 'scoped memory for tpu_custom_call.1']
    #allocation4 [shape = 's32[1]{0}', space=sflag, size = 0x4, scoped, tag = 'scoped memory for tpu_custom_call.1']
    #allocation5 [shape = 'u8[262144]{0}', space=vmem, size = 0x40000, scoped, tag = 'input window, operand 1, single buffered']
    #allocation6 [shape = 's32[1]{0}', space=sflag, size = 0x4, scoped, tag = 'scoped memory for tpu_custom_call.1']
    #allocation7 [shape = 'u8[65536]{0}', space=vmem, size = 0x10000, scoped, tag = 'output window, operand 0, single buffered']
    %7 = vsyncpa [#allocation3], 0
    %8 = vsyncpa [#allocation6], 0
    %9 = vsyncpa [#allocation4], 0
    // Predicated region
    $region2: #{tpu_custom_call.1} parent=1 // pred_check
      _
    $region3: #{tpu_custom_call.1} parent=1 // pred_check_branch
      %11 = sbr.rel (0) target = $region5
    $region4: #{tpu_custom_call.1} parent=1 // pred_region
      %13 = vsyncadd [#allocation3], 0
      %s14 = sshll.u32 %s0, 4
      %s15 = int_to_ptr.hbm [resolvable:$true] %s14
      %s16 = sshll.u32 [#allocation2], 4
      %s17 = int_to_ptr.vmem [resolvable:$true] %s16
      %22 = dma.hbm_to_vmem [thread:$0]  %s15, 128, %s17, [#allocation3], 64, 64, 4
    $region5: #{tpu_custom_call.1} parent=1 // pred_fallthru
      _
    // Predicated region
    $region6: #{tpu_custom_call.1} parent=1 // pred_check
      _
    $region7: #{tpu_custom_call.1} parent=1 // pred_check_branch
      %24 = sbr.rel (0) target = $region9
    $region8: #{tpu_custom_call.1} parent=1 // pred_region
      %26 = vsyncadd [#allocation6], 0
      %s27 = sshll.u32 %s1, 4
      %s28 = int_to_ptr.hbm [resolvable:$true] %s27
      %s29 = sshll.u32 [#allocation5], 4
      %s30 = int_to_ptr.vmem [resolvable:$true] %s29
      %35 = dma.hbm_to_vmem [thread:$0]  %s28, 8192, %s30, [#allocation6], 512, 512, 32
    $region9: #{tpu_custom_call.1} parent=1 // pred_fallthru
      _
    // Predicated region
    $region10: #{tpu_custom_call.1} parent=1 // pred_check
      _
    $region11: #{tpu_custom_call.1} parent=1 // pred_check_branch
      %37 = sbr.rel (0) target = $region13
    $region12: #{tpu_custom_call.1} parent=1 // pred_region
      %39 = dma.done [#allocation3], 128
    $region13: #{tpu_custom_call.1} parent=1 // pred_fallthru
      _
    // Predicated region
    $region14: #{tpu_custom_call.1} parent=1 // pred_check
      _
    $region15: #{tpu_custom_call.1} parent=1 // pred_check_branch
      %41 = sbr.rel (0) target = $region17
    $region16: #{tpu_custom_call.1} parent=1 // pred_region
      %43 = dma.done [#allocation6], 8192
    $region17: #{tpu_custom_call.1} parent=1 // pred_fallthru
      _
    %v44 = vld [vmem:[#allocation2] sm:$0xf]
    %v45 = vld [vmem:[#allocation2 + $0x4] sm:$0xf]
    %v46 = vld [vmem:[#allocation5] sm:$0xff]
    %v47 = vld [vmem:[#allocation5 + $0x8] sm:$0xff]
    %v48 = vld [vmem:[#allocation5 + $0x10] sm:$0xff]
    %v49 = vld [vmem:[#allocation5 + $0x18] sm:$0xff]
    %v50 = vld [vmem:[#allocation5 + $0x20] sm:$0xff]
    %v51 = vld [vmem:[#allocation5 + $0x28] sm:$0xff]
    %v52 = vld [vmem:[#allocation5 + $0x30] sm:$0xff]
    %v53 = vld [vmem:[#allocation5 + $0x38] sm:$0xff]
    %v54 = vld [vmem:[#allocation5 + $0x40] sm:$0xff]
    %v55 = vld [vmem:[#allocation5 + $0x48] sm:$0xff]
    %v56 = vld [vmem:[#allocation5 + $0x50] sm:$0xff]
    %v57 = vld [vmem:[#allocation5 + $0x58] sm:$0xff]
    %v58 = vld [vmem:[#allocation5 + $0x60] sm:$0xff]
    %v59 = vld [vmem:[#allocation5 + $0x68] sm:$0xff]
    %v60 = vld [vmem:[#allocation5 + $0x70] sm:$0xff]
    %v61 = vld [vmem:[#allocation5 + $0x78] sm:$0xff]
    %v62 = vld [vmem:[#allocation5 + $0x80] sm:$0xff]
    %v63 = vld [vmem:[#allocation5 + $0x88] sm:$0xff]
    %v64 = vld [vmem:[#allocation5 + $0x90] sm:$0xff]
    %v65 = vld [vmem:[#allocation5 + $0x98] sm:$0xff]
    %v66 = vld [vmem:[#allocation5 + $0xa0] sm:$0xff]
    %v67 = vld [vmem:[#allocation5 + $0xa8] sm:$0xff]
    %v68 = vld [vmem:[#allocation5 + $0xb0] sm:$0xff]
    %v69 = vld [vmem:[#allocation5 + $0xb8] sm:$0xff]
    %v70 = vld [vmem:[#allocation5 + $0xc0] sm:$0xff]
    %v71 = vld [vmem:[#allocation5 + $0xc8] sm:$0xff]
    %v72 = vld [vmem:[#allocation5 + $0xd0] sm:$0xff]
    %v73 = vld [vmem:[#allocation5 + $0xd8] sm:$0xff]
    %v74 = vld [vmem:[#allocation5 + $0xe0] sm:$0xff]
    %v75 = vld [vmem:[#allocation5 + $0xe8] sm:$0xff]
    %v76 = vld [vmem:[#allocation5 + $0xf0] sm:$0xff]
    %v77 = vld [vmem:[#allocation5 + $0xf8] sm:$0xff]
    %v78 = vld [vmem:[#allocation5 + $0x100] sm:$0xff]
    %v79 = vld [vmem:[#allocation5 + $0x108] sm:$0xff]
    %v80 = vld [vmem:[#allocation5 + $0x110] sm:$0xff]
    %v81 = vld [vmem:[#allocation5 + $0x118] sm:$0xff]
    %v82 = vld [vmem:[#allocation5 + $0x120] sm:$0xff]
    %v83 = vld [vmem:[#allocation5 + $0x128] sm:$0xff]
    %v84 = vld [vmem:[#allocation5 + $0x130] sm:$0xff]
    %v85 = vld [vmem:[#allocation5 + $0x138] sm:$0xff]
    %v86 = vld [vmem:[#allocation5 + $0x140] sm:$0xff]
    %v87 = vld [vmem:[#allocation5 + $0x148] sm:$0xff]
    %v88 = vld [vmem:[#allocation5 + $0x150] sm:$0xff]
    %v89 = vld [vmem:[#allocation5 + $0x158] sm:$0xff]
    %v90 = vld [vmem:[#allocation5 + $0x160] sm:$0xff]
    %v91 = vld [vmem:[#allocation5 + $0x168] sm:$0xff]
    %v92 = vld [vmem:[#allocation5 + $0x170] sm:$0xff]
    %v93 = vld [vmem:[#allocation5 + $0x178] sm:$0xff]
    %v94 = vld [vmem:[#allocation5 + $0x180] sm:$0xff]
    %v95 = vld [vmem:[#allocation5 + $0x188] sm:$0xff]
    %v96 = vld [vmem:[#allocation5 + $0x190] sm:$0xff]
    %v97 = vld [vmem:[#allocation5 + $0x198] sm:$0xff]
    %v98 = vld [vmem:[#allocation5 + $0x1a0] sm:$0xff]
    %v99 = vld [vmem:[#allocation5 + $0x1a8] sm:$0xff]
    %v100 = vld [vmem:[#allocation5 + $0x1b0] sm:$0xff]
    %v101 = vld [vmem:[#allocation5 + $0x1b8] sm:$0xff]
    %v102 = vld [vmem:[#allocation5 + $0x1c0] sm:$0xff]
    %v103 = vld [vmem:[#allocation5 + $0x1c8] sm:$0xff]
    %v104 = vld [vmem:[#allocation5 + $0x1d0] sm:$0xff]
    %v105 = vld [vmem:[#allocation5 + $0x1d8] sm:$0xff]
    %v106 = vld [vmem:[#allocation5 + $0x1e0] sm:$0xff]
    %v107 = vld [vmem:[#allocation5 + $0x1e8] sm:$0xff]
    %v108 = vld [vmem:[#allocation5 + $0x1f0] sm:$0xff]
    %v109 = vld [vmem:[#allocation5 + $0x1f8] sm:$0xff]
    %v112 = vunpack.c.l.b16 %v44
    %v113 = vunpack.c.l.b16 %v45
    %v114 = vpack.c.b16 %v113, %v112
    %v180 = vunpack.c.l.b16 %v46
    %v181 = vunpack.c.h.b16 %v46
    %v182 = vunpack.c.l.b16 %v47
    %v183 = vunpack.c.h.b16 %v47
    %v184 = vunpack.c.l.b16 %v48
    %v185 = vunpack.c.h.b16 %v48
    %v186 = vunpack.c.l.b16 %v49
    %v187 = vunpack.c.h.b16 %v49
    %v188 = vunpack.c.l.b16 %v50
    %v189 = vunpack.c.h.b16 %v50
    %v190 = vunpack.c.l.b16 %v51
    %v191 = vunpack.c.h.b16 %v51
    %v192 = vunpack.c.l.b16 %v52
    %v193 = vunpack.c.h.b16 %v52
    %v194 = vunpack.c.l.b16 %v53
    %v195 = vunpack.c.h.b16 %v53
    %v196 = vunpack.c.l.b16 %v54
    %v197 = vunpack.c.h.b16 %v54
    %v198 = vunpack.c.l.b16 %v55
    %v199 = vunpack.c.h.b16 %v55
    %v200 = vunpack.c.l.b16 %v56
    %v201 = vunpack.c.h.b16 %v56
    %v202 = vunpack.c.l.b16 %v57
    %v203 = vunpack.c.h.b16 %v57
    %v204 = vunpack.c.l.b16 %v58
    %v205 = vunpack.c.h.b16 %v58
    %v206 = vunpack.c.l.b16 %v59
    %v207 = vunpack.c.h.b16 %v59
    %v208 = vunpack.c.l.b16 %v60
    %v209 = vunpack.c.h.b16 %v60
    %v210 = vunpack.c.l.b16 %v61
    %v211 = vunpack.c.h.b16 %v61
    %v212 = vunpack.c.l.b16 %v62
    %v213 = vunpack.c.h.b16 %v62
    %v214 = vunpack.c.l.b16 %v63
    %v215 = vunpack.c.h.b16 %v63
    %v216 = vunpack.c.l.b16 %v64
    %v217 = vunpack.c.h.b16 %v64
    %v218 = vunpack.c.l.b16 %v65
    %v219 = vunpack.c.h.b16 %v65
    %v220 = vunpack.c.l.b16 %v66
    %v221 = vunpack.c.h.b16 %v66
    %v222 = vunpack.c.l.b16 %v67
    %v223 = vunpack.c.h.b16 %v67
    %v224 = vunpack.c.l.b16 %v68
    %v225 = vunpack.c.h.b16 %v68
    %v226 = vunpack.c.l.b16 %v69
    %v227 = vunpack.c.h.b16 %v69
    %v228 = vunpack.c.l.b16 %v70
    %v229 = vunpack.c.h.b16 %v70
    %v230 = vunpack.c.l.b16 %v71
    %v231 = vunpack.c.h.b16 %v71
    %v232 = vunpack.c.l.b16 %v72
    %v233 = vunpack.c.h.b16 %v72
    %v234 = vunpack.c.l.b16 %v73
    %v235 = vunpack.c.h.b16 %v73
    %v236 = vunpack.c.l.b16 %v74
    %v237 = vunpack.c.h.b16 %v74
    %v238 = vunpack.c.l.b16 %v75
    %v239 = vunpack.c.h.b16 %v75
    %v240 = vunpack.c.l.b16 %v76
    %v241 = vunpack.c.h.b16 %v76
    %v242 = vunpack.c.l.b16 %v77
    %v243 = vunpack.c.h.b16 %v77
    %v244 = vunpack.c.l.b16 %v78
    %v245 = vunpack.c.h.b16 %v78
    %v246 = vunpack.c.l.b16 %v79
    %v247 = vunpack.c.h.b16 %v79
    %v248 = vunpack.c.l.b16 %v80
    %v249 = vunpack.c.h.b16 %v80
    %v250 = vunpack.c.l.b16 %v81
    %v251 = vunpack.c.h.b16 %v81
    %v252 = vunpack.c.l.b16 %v82
    %v253 = vunpack.c.h.b16 %v82
    %v254 = vunpack.c.l.b16 %v83
    %v255 = vunpack.c.h.b16 %v83
    %v256 = vunpack.c.l.b16 %v84
    %v257 = vunpack.c.h.b16 %v84
    %v258 = vunpack.c.l.b16 %v85
    %v259 = vunpack.c.h.b16 %v85
    %v260 = vunpack.c.l.b16 %v86
    %v261 = vunpack.c.h.b16 %v86
    %v262 = vunpack.c.l.b16 %v87
    %v263 = vunpack.c.h.b16 %v87
    %v264 = vunpack.c.l.b16 %v88
    %v265 = vunpack.c.h.b16 %v88
    %v266 = vunpack.c.l.b16 %v89
    %v267 = vunpack.c.h.b16 %v89
    %v268 = vunpack.c.l.b16 %v90
    %v269 = vunpack.c.h.b16 %v90
    %v270 = vunpack.c.l.b16 %v91
    %v271 = vunpack.c.h.b16 %v91
    %v272 = vunpack.c.l.b16 %v92
    %v273 = vunpack.c.h.b16 %v92
    %v274 = vunpack.c.l.b16 %v93
    %v275 = vunpack.c.h.b16 %v93
    %v276 = vunpack.c.l.b16 %v94
    %v277 = vunpack.c.h.b16 %v94
    %v278 = vunpack.c.l.b16 %v95
    %v279 = vunpack.c.h.b16 %v95
    %v280 = vunpack.c.l.b16 %v96
    %v281 = vunpack.c.h.b16 %v96
    %v282 = vunpack.c.l.b16 %v97
    %v283 = vunpack.c.h.b16 %v97
    %v284 = vunpack.c.l.b16 %v98
    %v285 = vunpack.c.h.b16 %v98
    %v286 = vunpack.c.l.b16 %v99
    %v287 = vunpack.c.h.b16 %v99
    %v288 = vunpack.c.l.b16 %v100
    %v289 = vunpack.c.h.b16 %v100
    %v290 = vunpack.c.l.b16 %v101
    %v291 = vunpack.c.h.b16 %v101
    %v292 = vunpack.c.l.b16 %v102
    %v293 = vunpack.c.h.b16 %v102
    %v294 = vunpack.c.l.b16 %v103
    %v295 = vunpack.c.h.b16 %v103
    %v296 = vunpack.c.l.b16 %v104
    %v297 = vunpack.c.h.b16 %v104
    %v298 = vunpack.c.l.b16 %v105
    %v299 = vunpack.c.h.b16 %v105
    %v300 = vunpack.c.l.b16 %v106
    %v301 = vunpack.c.h.b16 %v106
    %v302 = vunpack.c.l.b16 %v107
    %v303 = vunpack.c.h.b16 %v107
    %v304 = vunpack.c.l.b16 %v108
    %v305 = vunpack.c.h.b16 %v108
    %v306 = vunpack.c.l.b16 %v109
    %v307 = vunpack.c.h.b16 %v109
    %v308 = vpack.c.b16 %v188, %v180
    %v309 = vpack.c.b16 %v189, %v181
    %v310 = vpack.c.b16 %v190, %v182
    %v311 = vpack.c.b16 %v191, %v183
    %v312 = vpack.c.b16 %v192, %v184
    %v313 = vpack.c.b16 %v193, %v185
    %v314 = vpack.c.b16 %v194, %v186
    %v315 = vpack.c.b16 %v195, %v187
    %v316 = vpack.c.b16 %v204, %v196
    %v317 = vpack.c.b16 %v205, %v197
    %v318 = vpack.c.b16 %v206, %v198
    %v319 = vpack.c.b16 %v207, %v199
    %v320 = vpack.c.b16 %v208, %v200
    %v321 = vpack.c.b16 %v209, %v201
    %v322 = vpack.c.b16 %v210, %v202
    %v323 = vpack.c.b16 %v211, %v203
    %v324 = vpack.c.b16 %v220, %v212
    %v325 = vpack.c.b16 %v221, %v213
    %v326 = vpack.c.b16 %v222, %v214
    %v327 = vpack.c.b16 %v223, %v215
    %v328 = vpack.c.b16 %v224, %v216
    %v329 = vpack.c.b16 %v225, %v217
    %v330 = vpack.c.b16 %v226, %v218
    %v331 = vpack.c.b16 %v227, %v219
    %v332 = vpack.c.b16 %v236, %v228
    %v333 = vpack.c.b16 %v237, %v229
    %v334 = vpack.c.b16 %v238, %v230
    %v335 = vpack.c.b16 %v239, %v231
    %v336 = vpack.c.b16 %v240, %v232
    %v337 = vpack.c.b16 %v241, %v233
    %v338 = vpack.c.b16 %v242, %v234
    %v339 = vpack.c.b16 %v243, %v235
    %v340 = vpack.c.b16 %v252, %v244
    %v341 = vpack.c.b16 %v253, %v245
    %v342 = vpack.c.b16 %v254, %v246
    %v343 = vpack.c.b16 %v255, %v247
    %v344 = vpack.c.b16 %v256, %v248
    %v345 = vpack.c.b16 %v257, %v249
    %v346 = vpack.c.b16 %v258, %v250
    %v347 = vpack.c.b16 %v259, %v251
    %v348 = vpack.c.b16 %v268, %v260
    %v349 = vpack.c.b16 %v269, %v261
    %v350 = vpack.c.b16 %v270, %v262
    %v351 = vpack.c.b16 %v271, %v263
    %v352 = vpack.c.b16 %v272, %v264
    %v353 = vpack.c.b16 %v273, %v265
    %v354 = vpack.c.b16 %v274, %v266
    %v355 = vpack.c.b16 %v275, %v267
    %v356 = vpack.c.b16 %v284, %v276
    %v357 = vpack.c.b16 %v285, %v277
    %v358 = vpack.c.b16 %v286, %v278
    %v359 = vpack.c.b16 %v287, %v279
    %v360 = vpack.c.b16 %v288, %v280
    %v361 = vpack.c.b16 %v289, %v281
    %v362 = vpack.c.b16 %v290, %v282
    %v363 = vpack.c.b16 %v291, %v283
    %v364 = vpack.c.b16 %v300, %v292
    %v365 = vpack.c.b16 %v301, %v293
    %v366 = vpack.c.b16 %v302, %v294
    %v367 = vpack.c.b16 %v303, %v295
    %v368 = vpack.c.b16 %v304, %v296
    %v369 = vpack.c.b16 %v305, %v297
    %v370 = vpack.c.b16 %v306, %v298
    %v371 = vpack.c.b16 %v307, %v299
    %436 = vmatpush.bf16.msra.mxu0 %v364
    %437 = vmatpush.bf16.msra.mxu0 %v356
    %438 = vmatpush.bf16.msra.mxu0 %v348
    %439 = vmatpush.bf16.msra.mxu0 %v340
    %440 = vmatpush.bf16.msra.mxu0 %v332
    %441 = vmatpush.bf16.msra.mxu0 %v324
    %442 = vmatpush.bf16.msra.mxu0 %v316
    %443 = vmatpush.bf16.msra.mxu0 %v308
    %444 = vmatmul.bf16.gmra.mxu0 %v114
    %v445 = vpop.f32.mrf.mxu0
    %v446 = vadd.f32 0.0, %v445
    %v447 = vpop.f32.mrf.mxu0
    %v448 = vadd.f32 0.0, %v447
    %449 = vdwg.mxu0
    %450 = vmatpush.bf16.msra.mxu0 %v365
    %451 = vmatpush.bf16.msra.mxu0 %v357
    %452 = vmatpush.bf16.msra.mxu0 %v349
    %453 = vmatpush.bf16.msra.mxu0 %v341
    %454 = vmatpush.bf16.msra.mxu0 %v333
    %455 = vmatpush.bf16.msra.mxu0 %v325
    %456 = vmatpush.bf16.msra.mxu0 %v317
    %457 = vmatpush.bf16.msra.mxu0 %v309
    %458 = vmatmul.bf16.gmra.mxu0 %v114
    %v459 = vpop.f32.mrf.mxu0
    %v460 = vadd.f32 0.0, %v459
    %v461 = vpop.f32.mrf.mxu0
    %v462 = vadd.f32 0.0, %v461
    %463 = vdwg.mxu0
    %464 = vmatpush.bf16.msra.mxu0 %v366
    %465 = vmatpush.bf16.msra.mxu0 %v358
    %466 = vmatpush.bf16.msra.mxu0 %v350
    %467 = vmatpush.bf16.msra.mxu0 %v342
    %468 = vmatpush.bf16.msra.mxu0 %v334
    %469 = vmatpush.bf16.msra.mxu0 %v326
    %470 = vmatpush.bf16.msra.mxu0 %v318
    %471 = vmatpush.bf16.msra.mxu0 %v310
    %472 = vmatmul.bf16.gmra.mxu0 %v114
    %v473 = vpop.f32.mrf.mxu0
    %v474 = vadd.f32 0.0, %v473
    %v475 = vpop.f32.mrf.mxu0
    %v476 = vadd.f32 0.0, %v475
    %477 = vdwg.mxu0
    %478 = vmatpush.bf16.msra.mxu0 %v367
    %479 = vmatpush.bf16.msra.mxu0 %v359
    %480 = vmatpush.bf16.msra.mxu0 %v351
    %481 = vmatpush.bf16.msra.mxu0 %v343
    %482 = vmatpush.bf16.msra.mxu0 %v335
    %483 = vmatpush.bf16.msra.mxu0 %v327
    %484 = vmatpush.bf16.msra.mxu0 %v319
    %485 = vmatpush.bf16.msra.mxu0 %v311
    %486 = vmatmul.bf16.gmra.mxu0 %v114
    %v487 = vpop.f32.mrf.mxu0
    %v488 = vadd.f32 0.0, %v487
    %v489 = vpop.f32.mrf.mxu0
    %v490 = vadd.f32 0.0, %v489
    %491 = vdwg.mxu0
    %492 = vmatpush.bf16.msra.mxu0 %v368
    %493 = vmatpush.bf16.msra.mxu0 %v360
    %494 = vmatpush.bf16.msra.mxu0 %v352
    %495 = vmatpush.bf16.msra.mxu0 %v344
    %496 = vmatpush.bf16.msra.mxu0 %v336
    %497 = vmatpush.bf16.msra.mxu0 %v328
    %498 = vmatpush.bf16.msra.mxu0 %v320
    %499 = vmatpush.bf16.msra.mxu0 %v312
    %500 = vmatmul.bf16.gmra.mxu0 %v114
    %v501 = vpop.f32.mrf.mxu0
    %v502 = vadd.f32 0.0, %v501
    %v503 = vpop.f32.mrf.mxu0
    %v504 = vadd.f32 0.0, %v503
    %505 = vdwg.mxu0
    %506 = vmatpush.bf16.msra.mxu0 %v369
    %507 = vmatpush.bf16.msra.mxu0 %v361
    %508 = vmatpush.bf16.msra.mxu0 %v353
    %509 = vmatpush.bf16.msra.mxu0 %v345
    %510 = vmatpush.bf16.msra.mxu0 %v337
    %511 = vmatpush.bf16.msra.mxu0 %v329
    %512 = vmatpush.bf16.msra.mxu0 %v321
    %513 = vmatpush.bf16.msra.mxu0 %v313
    %514 = vmatmul.bf16.gmra.mxu0 %v114
    %v515 = vpop.f32.mrf.mxu0
    %v516 = vadd.f32 0.0, %v515
    %v517 = vpop.f32.mrf.mxu0
    %v518 = vadd.f32 0.0, %v517
    %519 = vdwg.mxu0
    %520 = vmatpush.bf16.msra.mxu0 %v370
    %521 = vmatpush.bf16.msra.mxu0 %v362
    %522 = vmatpush.bf16.msra.mxu0 %v354
    %523 = vmatpush.bf16.msra.mxu0 %v346
    %524 = vmatpush.bf16.msra.mxu0 %v338
    %525 = vmatpush.bf16.msra.mxu0 %v330
    %526 = vmatpush.bf16.msra.mxu0 %v322
    %527 = vmatpush.bf16.msra.mxu0 %v314
    %528 = vmatmul.bf16.gmra.mxu0 %v114
    %v529 = vpop.f32.mrf.mxu0
    %v530 = vadd.f32 0.0, %v529
    %v531 = vpop.f32.mrf.mxu0
    %v532 = vadd.f32 0.0, %v531
    %533 = vdwg.mxu0
    %534 = vmatpush.bf16.msra.mxu0 %v371
    %535 = vmatpush.bf16.msra.mxu0 %v363
    %536 = vmatpush.bf16.msra.mxu0 %v355
    %537 = vmatpush.bf16.msra.mxu0 %v347
    %538 = vmatpush.bf16.msra.mxu0 %v339
    %539 = vmatpush.bf16.msra.mxu0 %v331
    %540 = vmatpush.bf16.msra.mxu0 %v323
    %541 = vmatpush.bf16.msra.mxu0 %v315
    %542 = vmatmul.bf16.gmra.mxu0 %v114
    %v543 = vpop.f32.mrf.mxu0
    %v544 = vadd.f32 0.0, %v543
    %v545 = vpop.f32.mrf.mxu0
    %v546 = vadd.f32 0.0, %v545
    %547 = vdwg.mxu0
    %548 = vst [vmem:[#allocation7] sm:$0xff] %v446
    %549 = vst [vmem:[#allocation7 + $0x8] sm:$0xff] %v460
    %550 = vst [vmem:[#allocation7 + $0x10] sm:$0xff] %v474
    %551 = vst [vmem:[#allocation7 + $0x18] sm:$0xff] %v488
    %552 = vst [vmem:[#allocation7 + $0x20] sm:$0xff] %v502
    %553 = vst [vmem:[#allocation7 + $0x28] sm:$0xff] %v516
    %554 = vst [vmem:[#allocation7 + $0x30] sm:$0xff] %v530
    %555 = vst [vmem:[#allocation7 + $0x38] sm:$0xff] %v544
    %556 = vst [vmem:[#allocation7 + $0x40] sm:$0xff] %v448
    %557 = vst [vmem:[#allocation7 + $0x48] sm:$0xff] %v462
    %558 = vst [vmem:[#allocation7 + $0x50] sm:$0xff] %v476
    %559 = vst [vmem:[#allocation7 + $0x58] sm:$0xff] %v490
    %560 = vst [vmem:[#allocation7 + $0x60] sm:$0xff] %v504
    %561 = vst [vmem:[#allocation7 + $0x68] sm:$0xff] %v518
    %562 = vst [vmem:[#allocation7 + $0x70] sm:$0xff] %v532
    %563 = vst [vmem:[#allocation7 + $0x78] sm:$0xff] %v546
    // Predicated region
    $region18: #{tpu_custom_call.1} parent=1 // pred_check
      _
    $region19: #{tpu_custom_call.1} parent=1 // pred_check_branch
      %565 = sbr.rel (0) target = $region21
    $region20: #{tpu_custom_call.1} parent=1 // pred_region
      %567 = vsyncadd [#allocation4], 0
      %s568 = sshll.u32 [#allocation7], 4
      %s569 = int_to_ptr.vmem [resolvable:$true] %s568
      %s570 = sshll.u32 %s2, 4
      %s571 = int_to_ptr.hbm [resolvable:$true] %s570
      %576 = dma.vmem_to_hbm [thread:$0]  %s569, 2048, %s571, [#allocation4], 1024, 1024, 64
    $region21: #{tpu_custom_call.1} parent=1 // pred_fallthru
      _
    // Predicated region
    $region22: #{tpu_custom_call.1} parent=1 // pred_check
      _
    $region23: #{tpu_custom_call.1} parent=1 // pred_check_branch
      %578 = sbr.rel (0) target = $region25
    $region24: #{tpu_custom_call.1} parent=1 // pred_region
      %580 = dma.done [#allocation4], 2048
    $region25: #{tpu_custom_call.1} parent=1 // pred_fallthru
      _
    %581 = vsyncpa [#allocation3], 1
    %582 = vsyncpa [#allocation6], 1
    %583 = vsyncpa [#allocation4], 1

</llo_original>
